<compile_context>
chip_gen: v6e
topology: v6e:2x2x1
jax: 0.10.0
libtpu: 0.0.40
codegen_flags: <defaults>
</compile_context>

<pallas_src>
import functools

import jax
import jax.numpy as jnp
import numpy as np
from jax import lax
from jax.experimental import pallas as pl
from jax.experimental.pallas import tpu as pltpu


def _round_up(x: int, m: int) -> int:
    return ((x + m - 1) // m) * m


def _grid_sample_kernel(bounds_ref, coords_ref, feat_ref, out_ref,
                        acc_ref, idx_ref, wts_ref,
                        *, H: int, W: int, HW_tile: int, n_q_tiles: int,
                        feat_resident: bool, mxu_dtype):
    """One (batch, NQ-tile, HW-tile) grid step.

    bounds_ref: (B*n_q_tiles*2,) i32 SMEM scalar-prefetch: [lo, hi] pixel-id range per tile
    coords_ref: (1, 2, NQ_tile)  normalized (x, y) coords in [-1, 1]
    feat_ref  : (1, C, HW_pad) if feat_resident else (1, C, HW_tile), channel-first features
    out_ref   : (1, C, NQ_tile) sampled features (written on last HW step)
    acc_ref   : (C, NQ_tile) f32 accumulator scratch
    idx_ref   : (1, NQ_tile) i32 flat index of the (y0, x0) corner
    wts_ref   : (4, NQ_tile) f32 per-corner weights (already zeroed when out of bounds)
    """
    b = pl.program_id(0)
    q = pl.program_id(1)
    hw_i = pl.program_id(2)

    @pl.when(hw_i == 0)
    def _init():
        acc_ref[...] = jnp.zeros_like(acc_ref)
        g = coords_ref[0].astype(jnp.float32)        # (2, NQ_tile)
        gx = g[0:1, :]
        gy = g[1:2, :]
        # align_corners=True mapping: [-1, 1] -> [0, dim-1]
        ix = (gx + 1.0) * (0.5 * (W - 1))
        iy = (gy + 1.0) * (0.5 * (H - 1))
        x0f = jnp.floor(ix)
        y0f = jnp.floor(iy)
        wx1 = ix - x0f
        wx0 = 1.0 - wx1
        wy1 = iy - y0f
        wy0 = 1.0 - wy1
        # zeros padding: zero the weight of any corner outside the image.
        vx0 = ((x0f >= 0.0) & (x0f <= W - 1.0)).astype(jnp.float32)
        vx1 = ((x0f >= -1.0) & (x0f <= W - 2.0)).astype(jnp.float32)   # x1 = x0 + 1 valid
        vy0 = ((y0f >= 0.0) & (y0f <= H - 1.0)).astype(jnp.float32)
        vy1 = ((y0f >= -1.0) & (y0f <= H - 2.0)).astype(jnp.float32)   # y1 = y0 + 1 valid
        wts_ref[0:1, :] = wx0 * wy0 * vx0 * vy0      # corner (y0, x0) -> offset 0
        wts_ref[1:2, :] = wx1 * wy0 * vx1 * vy0      # corner (y0, x1) -> offset 1
        wts_ref[2:3, :] = wx0 * wy1 * vx0 * vy1      # corner (y1, x0) -> offset W
        wts_ref[3:4, :] = wx1 * wy1 * vx1 * vy1      # corner (y1, x1) -> offset W + 1
        # int32 index math: exact for any H*W (f32 path only exact below 2^24 pixels).
        idx_ref[...] = y0f.astype(jnp.int32) * W + x0f.astype(jnp.int32)

    nq_tile = idx_ref.shape[1]
    hw_start = pl.multiple_of(hw_i * HW_tile, HW_tile)

    # Pixel-id range this NQ tile's corners can touch (precomputed in the wrapper, SMEM).
    base = (b * n_q_tiles + q) * 2
    lo = bounds_ref[base]
    hi = bounds_ref[base + 1]

    # Skip HW tiles no query in this NQ tile touches (each query hits <= 2 HW tiles).
    @pl.when((hw_start <= hi) & (hw_start + HW_tile > lo))
    def _compute():
        if feat_resident:
            feat_blk = feat_ref[0, :, pl.ds(hw_start, HW_tile)]     # slice VMEM-resident map
        else:
            feat_blk = feat_ref[0]                                  # streamed (1, C, HW_tile)

        s = idx_ref[...] - hw_start                                 # (1, NQ_tile)
        iota = lax.broadcasted_iota(jnp.int32, (HW_tile, nq_tile), 0)
        w00 = wts_ref[0:1, :].astype(mxu_dtype)                     # tiny per-row casts only
        w01 = wts_ref[1:2, :].astype(mxu_dtype)
        w10 = wts_ref[2:3, :].astype(mxu_dtype)
        w11 = wts_ref[3:4, :].astype(mxu_dtype)
        zero = jnp.zeros((), dtype=mxu_dtype)
        if W > 1:
            # Nested select: corner offsets 0, 1, W, W+1 are distinct for W > 1.
            # OOB corners may alias a valid pixel id, but their weight row is 0.
            wmat_t = jnp.where(iota == s, w00,
                     jnp.where(iota == s + 1, w01,
                     jnp.where(iota == s + W, w10,
                     jnp.where(iota == s + (W + 1), w11, zero))))
        else:
            # W == 1: offsets 1 and W coincide; additive form stays exact.
            wmat_t = (jnp.where(iota == s, w00, zero)
                      + jnp.where(iota == s + 1, w01, zero)
                      + jnp.where(iota == s + W, w10, zero)
                      + jnp.where(iota == s + (W + 1), w11, zero))

        acc_ref[...] += jnp.dot(feat_blk, wmat_t, preferred_element_type=jnp.float32)

    @pl.when(hw_i == pl.num_programs(2) - 1)
    def _finalize():
        out_ref[0] = acc_ref[...].astype(out_ref.dtype)


def query_uv_extractor_forward(x, y, down_scale=1.0, mxu_dtype=jnp.bfloat16,
                               feat_resident=None):
    """Pallas implementation of query_uv_extractor.forward (do_norm=False, pos_emb=False).

    x: (B, C, H, W) features
    y: (B, N, S, 2) normalized coords in [-1, 1] (grid_sample convention)
    returns (output_dict, debug_info) with output_dict['img_feature'] of shape (B, N, S, C)
    """
    B, C, H, W = x.shape
    _, N, S, _ = y.shape
    HW = H * W
    NQ = N * S

    # Tile sizes: multiples of 128 that evenly divide the padded extents (no full-axis
    # fallback).  NQ cap drops to 256 for B == 1 so v7x's 2 TCs both get parallel work.
    nq_cap = 512 if B > 1 else 256
    NQ_tile = min(nq_cap, _round_up(NQ, 128))
    NQ_pad = _round_up(NQ, NQ_tile)
    HW_tile = min(1024, _round_up(HW, 128))
    HW_pad = _round_up(HW, HW_tile)
    n_q_tiles = NQ_pad // NQ_tile
    n_hw_tiles = HW_pad // HW_tile

    # Channel-first features, cast once to the MXU dtype (bf16 stream by default);
    # zero-pad the flattened HW axis (padded pixels never carry nonzero weight).
    feat = x.reshape(B, C, HW).astype(mxu_dtype)
    if HW_pad != HW:
        feat = jnp.pad(feat, ((0, 0), (0, 0), (0, HW_pad - HW)))
    coords = jnp.transpose(y.reshape(B, NQ, 2), (0, 2, 1)).astype(jnp.float32)  # (B, 2, NQ)
    if NQ_pad != NQ:
        # Edge-replicate padded queries (keeps per-tile index bounds tight); their outputs
        # are sliced off below.
        coords = jnp.pad(coords, ((0, 0), (0, 0), (0, NQ_pad - NQ)), mode="edge")

    # Per-(batch, NQ-tile) flat pixel-id range touched by the 4 bilinear corners
    # (scalar-prefetched so the kernel can skip irrelevant HW tiles).  +-1 safety margin.
    ix = (coords[:, 0, :] + 1.0) * (0.5 * (W - 1))
    iy = (coords[:, 1, :] + 1.0) * (0.5 * (H - 1))
    idx = (jnp.floor(iy).astype(jnp.int32) * W
           + jnp.floor(ix).astype(jnp.int32)).reshape(B, n_q_tiles, NQ_tile)
    lo = idx.min(axis=-1) - 1
    hi = idx.max(axis=-1) + (W + 2)
    bounds = jnp.stack([lo, hi], axis=-1).reshape(-1).astype(jnp.int32)  # 1D -> cheap SMEM

    # Batch-resident feature map if (double-buffered) it fits a conservative VMEM budget
    # (24 MiB leaves headroom under the 48 MiB limit even on v7x's 64 MiB VMEM).
    itemsize = jnp.dtype(mxu_dtype).itemsize
    if feat_resident is None:
        feat_resident = 2 * C * HW_pad * itemsize <= 24 * 1024 * 1024
    if feat_resident:
        feat_spec = pl.BlockSpec((1, C, HW_pad), lambda b, q, k, bounds: (b, 0, 0))
    else:
        feat_spec = pl.BlockSpec((1, C, HW_tile), lambda b, q, k, bounds: (b, 0, k))

    kernel = functools.partial(_grid_sample_kernel, H=H, W=W, HW_tile=HW_tile,
                               n_q_tiles=n_q_tiles, feat_resident=feat_resident,
                               mxu_dtype=mxu_dtype)

    out = pl.pallas_call(
        kernel,
        out_shape=jax.ShapeDtypeStruct((B, C, NQ_pad), x.dtype),
        grid_spec=pltpu.PrefetchScalarGridSpec(
            num_scalar_prefetch=1,
            grid=(B, n_q_tiles, n_hw_tiles),
            in_specs=[
                pl.BlockSpec((1, 2, NQ_tile), lambda b, q, k, bounds: (b, 0, q)),
                feat_spec,
            ],
            out_specs=pl.BlockSpec((1, C, NQ_tile), lambda b, q, k, bounds: (b, 0, q)),
            scratch_shapes=[
                pltpu.VMEM((C, NQ_tile), jnp.float32),   # accumulator
                pltpu.VMEM((1, NQ_tile), jnp.int32),     # flat (y0, x0) index per query
                pltpu.VMEM((4, NQ_tile), jnp.float32),   # 4 corner weights per query
            ],
        ),
        compiler_params=pltpu.CompilerParams(
            dimension_semantics=("parallel", "parallel", "arbitrary"),
            vmem_limit_bytes=48 * 1024 * 1024,
        ),
    )(bounds, coords, feat)

    # TODO(synk): if C >= 128 in production, emit (B, NQ, C) from the kernel and drop this
    # transpose; for small C the lane-dense NQ layout + XLA transpose is cheaper.
    feature = jnp.transpose(out[:, :, :NQ], (0, 2, 1)).reshape(B, N, S, C)
    output_dict = {"img_feature": feature}
    debug_info = {}
    return output_dict, debug_info


def _reference_grid_sample_numpy(x, y):
    """Pure-numpy bilinear grid_sample (align_corners=True, zeros padding), B N S C output."""
    x = np.asarray(x)
    y = np.asarray(y)
    B, C, H, W = x.shape
    _, N, S, _ = y.shape
    out = np.zeros((B, N, S, C), dtype=np.float32)
    for b in range(B):
        for n in range(N):
            for s in range(S):
                gx, gy = y[b, n, s]
                ix = (gx + 1.0) * 0.5 * (W - 1)
                iy = (gy + 1.0) * 0.5 * (H - 1)
                x0 = int(np.floor(ix)); x1 = x0 + 1
                y0 = int(np.floor(iy)); y1 = y0 + 1
                wx1 = ix - x0; wx0 = 1.0 - wx1
                wy1 = iy - y0; wy0 = 1.0 - wy1
                acc = np.zeros((C,), dtype=np.float32)
                for (xc, yc, w) in ((x0, y0, wx0 * wy0), (x1, y0, wx1 * wy0),
                                    (x0, y1, wx0 * wy1), (x1, y1, wx1 * wy1)):
                    if 0 <= xc < W and 0 <= yc < H:
                        acc += w * x[b, :, yc, xc]
                out[b, n, s] = acc
    return out


if __name__ == "__main__":
    key = jax.random.PRNGKey(0)
    kx1, ky1, kx2, ky2 = jax.random.split(key, 4)

    # Case 1: spec shapes — x (2, 4, 16, 16), y (2, 8, 4, 2); coords slightly past [-1, 1]
    # to exercise zeros padding.
    x1 = jax.random.normal(kx1, (2, 4, 16, 16), dtype=jnp.float32)
    y1 = jax.random.uniform(ky1, (2, 8, 4, 2), minval=-1.1, maxval=1.1, dtype=jnp.float32)
    ref1 = _reference_grid_sample_numpy(x1, y1)

    out_f32, _ = query_uv_extractor_forward(x1, y1, down_scale=4.0, mxu_dtype=jnp.float32)
    feat_f32 = jax.block_until_ready(out_f32["img_feature"])
    np.testing.assert_allclose(np.asarray(feat_f32), ref1, rtol=1e-3, atol=1e-3)

    out_bf16, _ = query_uv_extractor_forward(x1, y1, down_scale=4.0)   # bf16 fast path
    feat_bf16 = jax.block_until_ready(out_bf16["img_feature"])
    np.testing.assert_allclose(np.asarray(feat_bf16), ref1, rtol=3e-2, atol=3e-2)

    # Case 2: multiple HW tiles (exercises the tile-skip gate, HW/NQ padding, B=1 tiling)
    # plus the non-resident feature-streaming fallback path.
    x2 = jax.random.normal(kx2, (1, 8, 40, 40), dtype=jnp.float32)
    y2 = jax.random.uniform(ky2, (1, 6, 5, 2), minval=-1.05, maxval=1.05, dtype=jnp.float32)
    ref2 = _reference_grid_sample_numpy(x2, y2)

    out2, _ = query_uv_extractor_forward(x2, y2, mxu_dtype=jnp.float32)
    np.testing.assert_allclose(np.asarray(jax.block_until_ready(out2["img_feature"])),
                               ref2, rtol=1e-3, atol=1e-3)

    out2_tiled, _ = query_uv_extractor_forward(x2, y2, mxu_dtype=jnp.float32,
                                               feat_resident=False)
    np.testing.assert_allclose(np.asarray(jax.block_until_ready(out2_tiled["img_feature"])),
                               ref2, rtol=1e-3, atol=1e-3)

    print("KERNEL_OK")
</pallas_src>

<mosaic_0001>
module attributes {stable_mosaic.version = 11 : i64} {
  func.func @_grid_sample_kernel(%arg0: i32, %arg1: i32, %arg2: i32, %arg3: memref<4xi32, #tpu.memory_space<smem>>, %arg4: memref<1x2x128xf32, #tpu.memory_space<vmem>>, %arg5: memref<1x4x256xf32, #tpu.memory_space<vmem>>, %arg6: memref<1x4x128xf32, #tpu.memory_space<vmem>>, %arg7: memref<4x128xf32, #tpu.memory_space<vmem>>, %arg8: memref<1x128xi32, #tpu.memory_space<vmem>>, %arg9: memref<4x128xf32, #tpu.memory_space<vmem>>) attributes {dimension_semantics = [#tpu.dimension_semantics<parallel>, #tpu.dimension_semantics<parallel>, #tpu.dimension_semantics<arbitrary>], iteration_bounds = array<i64: 2, 1, 1>, scalar_prefetch = 1 : i64, scratch_operands = 3 : i64, tpu.core_type = #tpu.core_type<tc>, window_params = [{transform_indices = @transform_0, window_bounds = array<i64: 1, 2, 128>}, {transform_indices = @transform_1, window_bounds = array<i64: 1, 4, 256>}, {transform_indices = @transform_2, window_bounds = array<i64: 1, 4, 128>}]} {
    %c0_i32 = arith.constant 0 : i32
    %0 = arith.cmpi eq, %arg2, %c0_i32 : i32
    %1 = arith.extui %0 : i1 to i32
    %c0_i32_0 = arith.constant 0 : i32
    %2 = arith.cmpi ne, %1, %c0_i32_0 : i32
    scf.if %2 {
      %cst = arith.constant 0.000000e+00 : f32
      %22 = vector.broadcast %cst : f32 to vector<4x128xf32>
      %c0 = arith.constant 0 : index
      %c0_6 = arith.constant 0 : index
      %23 = vector.load %arg7[%c0, %c0_6] : memref<4x128xf32, #tpu.memory_space<vmem>>, vector<4x128xf32>
      tpu.vector_store %arg7[%c0, %c0_6], %22 {strides = array<i32>} : memref<4x128xf32, #tpu.memory_space<vmem>>, vector<4x128xf32>,
      %c0_7 = arith.constant 0 : index
      %c0_8 = arith.constant 0 : index
      %c0_9 = arith.constant 0 : index
      %24 = vector.load %arg4[%c0_7, %c0_8, %c0_9] : memref<1x2x128xf32, #tpu.memory_space<vmem>>, vector<1x2x128xf32>
      %25 = vector.shape_cast %24 : vector<1x2x128xf32> to vector<2x128xf32>
      %26 = vector.extract_strided_slice %25 {offsets = [0, 0], sizes = [1, 128], strides = [1, 1]} : vector<2x128xf32> to vector<1x128xf32>
      %27 = vector.extract_strided_slice %25 {offsets = [1, 0], sizes = [1, 128], strides = [1, 1]} : vector<2x128xf32> to vector<1x128xf32>
      %cst_10 = arith.constant 1.000000e+00 : f32
      %28 = vector.broadcast %cst_10 : f32 to vector<1x128xf32>
      %29 = arith.addf %26, %28 : vector<1x128xf32>
      %cst_11 = arith.constant 7.500000e+00 : f32
      %30 = vector.broadcast %cst_11 : f32 to vector<1x128xf32>
      %31 = arith.mulf %29, %30 : vector<1x128xf32>
      %cst_12 = arith.constant 1.000000e+00 : f32
      %32 = vector.broadcast %cst_12 : f32 to vector<1x128xf32>
      %33 = arith.addf %27, %32 : vector<1x128xf32>
      %cst_13 = arith.constant 7.500000e+00 : f32
      %34 = vector.broadcast %cst_13 : f32 to vector<1x128xf32>
      %35 = arith.mulf %33, %34 : vector<1x128xf32>
      %36 = math.floor %31 : vector<1x128xf32>
      %37 = math.floor %35 : vector<1x128xf32>
      %38 = arith.subf %31, %36 : vector<1x128xf32>
      %cst_14 = arith.constant 1.000000e+00 : f32
      %39 = vector.broadcast %cst_14 : f32 to vector<1x128xf32>
      %40 = arith.subf %39, %38 : vector<1x128xf32>
      %41 = arith.subf %35, %37 : vector<1x128xf32>
      %cst_15 = arith.constant 1.000000e+00 : f32
      %42 = vector.broadcast %cst_15 : f32 to vector<1x128xf32>
      %43 = arith.subf %42, %41 : vector<1x128xf32>
      %cst_16 = arith.constant 0.000000e+00 : f32
      %44 = vector.broadcast %cst_16 : f32 to vector<1x128xf32>
      %45 = arith.cmpf oge, %36, %44 : vector<1x128xf32>
      %cst_17 = arith.constant 1.500000e+01 : f32
      %46 = vector.broadcast %cst_17 : f32 to vector<1x128xf32>
      %47 = arith.cmpf ole, %36, %46 : vector<1x128xf32>
      %48 = arith.andi %45, %47 : vector<1x128xi1>
      %49 = arith.extui %48 : vector<1x128xi1> to vector<1x128xi32>
      %50 = arith.sitofp %49 : vector<1x128xi32> to vector<1x128xf32>
      %cst_18 = arith.constant -1.000000e+00 : f32
      %51 = vector.broadcast %cst_18 : f32 to vector<1x128xf32>
      %52 = arith.cmpf oge, %36, %51 : vector<1x128xf32>
      %cst_19 = arith.constant 1.400000e+01 : f32
      %53 = vector.broadcast %cst_19 : f32 to vector<1x128xf32>
      %54 = arith.cmpf ole, %36, %53 : vector<1x128xf32>
      %55 = arith.andi %52, %54 : vector<1x128xi1>
      %56 = arith.extui %55 : vector<1x128xi1> to vector<1x128xi32>
      %57 = arith.sitofp %56 : vector<1x128xi32> to vector<1x128xf32>
      %cst_20 = arith.constant 0.000000e+00 : f32
      %58 = vector.broadcast %cst_20 : f32 to vector<1x128xf32>
      %59 = arith.cmpf oge, %37, %58 : vector<1x128xf32>
      %cst_21 = arith.constant 1.500000e+01 : f32
      %60 = vector.broadcast %cst_21 : f32 to vector<1x128xf32>
      %61 = arith.cmpf ole, %37, %60 : vector<1x128xf32>
      %62 = arith.andi %59, %61 : vector<1x128xi1>
      %63 = arith.extui %62 : vector<1x128xi1> to vector<1x128xi32>
      %64 = arith.sitofp %63 : vector<1x128xi32> to vector<1x128xf32>
      %cst_22 = arith.constant -1.000000e+00 : f32
      %65 = vector.broadcast %cst_22 : f32 to vector<1x128xf32>
      %66 = arith.cmpf oge, %37, %65 : vector<1x128xf32>
      %cst_23 = arith.constant 1.400000e+01 : f32
      %67 = vector.broadcast %cst_23 : f32 to vector<1x128xf32>
      %68 = arith.cmpf ole, %37, %67 : vector<1x128xf32>
      %69 = arith.andi %66, %68 : vector<1x128xi1>
      %70 = arith.extui %69 : vector<1x128xi1> to vector<1x128xi32>
      %71 = arith.sitofp %70 : vector<1x128xi32> to vector<1x128xf32>
      %72 = arith.mulf %40, %43 : vector<1x128xf32>
      %73 = arith.mulf %72, %50 : vector<1x128xf32>
      %74 = arith.mulf %73, %64 : vector<1x128xf32>
      %c0_24 = arith.constant 0 : index
      %c0_25 = arith.constant 0 : index
      %75 = vector.load %arg9[%c0_24, %c0_25] : memref<4x128xf32, #tpu.memory_space<vmem>>, vector<1x128xf32>
      tpu.vector_store %arg9[%c0_24, %c0_25], %74 {strides = array<i32>} : memref<4x128xf32, #tpu.memory_space<vmem>>, vector<1x128xf32>,
      %76 = arith.mulf %38, %43 : vector<1x128xf32>
      %77 = arith.mulf %76, %57 : vector<1x128xf32>
      %78 = arith.mulf %77, %64 : vector<1x128xf32>
      %c1 = arith.constant 1 : index
      %c0_26 = arith.constant 0 : index
      %79 = vector.load %arg9[%c1, %c0_26] : memref<4x128xf32, #tpu.memory_space<vmem>>, vector<1x128xf32>
      tpu.vector_store %arg9[%c1, %c0_26], %78 {strides = array<i32>} : memref<4x128xf32, #tpu.memory_space<vmem>>, vector<1x128xf32>,
      %80 = arith.mulf %40, %41 : vector<1x128xf32>
      %81 = arith.mulf %80, %50 : vector<1x128xf32>
      %82 = arith.mulf %81, %71 : vector<1x128xf32>
      %c2 = arith.constant 2 : index
      %c0_27 = arith.constant 0 : index
      %83 = vector.load %arg9[%c2, %c0_27] : memref<4x128xf32, #tpu.memory_space<vmem>>, vector<1x128xf32>
      tpu.vector_store %arg9[%c2, %c0_27], %82 {strides = array<i32>} : memref<4x128xf32, #tpu.memory_space<vmem>>, vector<1x128xf32>,
      %84 = arith.mulf %38, %41 : vector<1x128xf32>
      %85 = arith.mulf %84, %57 : vector<1x128xf32>
      %86 = arith.mulf %85, %71 : vector<1x128xf32>
      %c3 = arith.constant 3 : index
      %c0_28 = arith.constant 0 : index
      %87 = vector.load %arg9[%c3, %c0_28] : memref<4x128xf32, #tpu.memory_space<vmem>>, vector<1x128xf32>
      tpu.vector_store %arg9[%c3, %c0_28], %86 {strides = array<i32>} : memref<4x128xf32, #tpu.memory_space<vmem>>, vector<1x128xf32>,
      %88 = arith.fptosi %37 : vector<1x128xf32> to vector<1x128xi32>
      %c16_i32 = arith.constant 16 : i32
      %89 = vector.broadcast %c16_i32 : i32 to vector<1x128xi32>
      %90 = arith.muli %88, %89 : vector<1x128xi32>
      %91 = arith.fptosi %36 : vector<1x128xf32> to vector<1x128xi32>
      %92 = arith.addi %90, %91 : vector<1x128xi32>
      %c0_29 = arith.constant 0 : index
      %c0_30 = arith.constant 0 : index
      %93 = vector.load %arg8[%c0_29, %c0_30] : memref<1x128xi32, #tpu.memory_space<vmem>>, vector<1x128xi32>
      tpu.vector_store %arg8[%c0_29, %c0_30], %92 {strides = array<i32>} : memref<1x128xi32, #tpu.memory_space<vmem>>, vector<1x128xi32>,
    } else {
    }
    %c256_i32 = arith.constant 256 : i32
    %3 = arith.muli %arg2, %c256_i32 : i32
    %4 = tpu.assume_multiple %3, 256 : i32
    %c1_i32 = arith.constant 1 : i32
    %5 = arith.muli %arg0, %c1_i32 : i32
    %6 = arith.addi %5, %arg1 : i32
    %c2_i32 = arith.constant 2 : i32
    %7 = arith.muli %6, %c2_i32 : i32
    %8 = arith.index_cast %7 : i32 to index
    %9 = memref.load %arg3[%8] : memref<4xi32, #tpu.memory_space<smem>>
    %c1_i32_1 = arith.constant 1 : i32
    %10 = arith.addi %7, %c1_i32_1 : i32
    %11 = arith.index_cast %10 : i32 to index
    %12 = memref.load %arg3[%11] : memref<4xi32, #tpu.memory_space<smem>>
    %13 = arith.cmpi sle, %4, %12 : i32
    %c256_i32_2 = arith.constant 256 : i32
    %14 = arith.addi %4, %c256_i32_2 : i32
    %15 = arith.cmpi sgt, %14, %9 : i32
    %16 = arith.andi %13, %15 : i1
    %17 = arith.extui %16 : i1 to i32
    %c0_i32_3 = arith.constant 0 : i32
    %18 = arith.cmpi ne, %17, %c0_i32_3 : i32
    scf.if %18 {
      %c0 = arith.constant 0 : index
      %c0_6 = arith.constant 0 : index
      %22 = arith.index_cast %4 : i32 to index
      %23 = vector.load %arg5[%c0, %c0_6, %22] : memref<1x4x256xf32, #tpu.memory_space<vmem>>, vector<1x4x256xf32>
      %24 = vector.shape_cast %23 : vector<1x4x256xf32> to vector<4x256xf32>
      %c0_7 = arith.constant 0 : index
      %c0_8 = arith.constant 0 : index
      %25 = vector.load %arg8[%c0_7, %c0_8] : memref<1x128xi32, #tpu.memory_space<vmem>>, vector<1x128xi32>
      %26 = vector.broadcast %4 : i32 to vector<1x128xi32>
      %27 = arith.subi %25, %26 : vector<1x128xi32>
      %28 = tpu.iota {dimensions = array<i32: 0>} : vector<256x128xi32>
      %c0_9 = arith.constant 0 : index
      %c0_10 = arith.constant 0 : index
      %29 = vector.load %arg9[%c0_9, %c0_10] : memref<4x128xf32, #tpu.memory_space<vmem>>, vector<1x128xf32>
      %c1 = arith.constant 1 : index
      %c0_11 = arith.constant 0 : index
      %30 = vector.load %arg9[%c1, %c0_11] : memref<4x128xf32, #tpu.memory_space<vmem>>, vector<1x128xf32>
      %c2 = arith.constant 2 : index
      %c0_12 = arith.constant 0 : index
      %31 = vector.load %arg9[%c2, %c0_12] : memref<4x128xf32, #tpu.memory_space<vmem>>, vector<1x128xf32>
      %c3 = arith.constant 3 : index
      %c0_13 = arith.constant 0 : index
      %32 = vector.load %arg9[%c3, %c0_13] : memref<4x128xf32, #tpu.memory_space<vmem>>, vector<1x128xf32>
      %33 = vector.broadcast %27 : vector<1x128xi32> to vector<256x128xi32>
      %34 = arith.cmpi eq, %28, %33 : vector<256x128xi32>
      %c1_i32_14 = arith.constant 1 : i32
      %35 = vector.broadcast %c1_i32_14 : i32 to vector<1x128xi32>
      %36 = arith.addi %27, %35 : vector<1x128xi32>
      %37 = vector.broadcast %36 : vector<1x128xi32> to vector<256x128xi32>
      %38 = arith.cmpi eq, %28, %37 : vector<256x128xi32>
      %c16_i32 = arith.constant 16 : i32
      %39 = vector.broadcast %c16_i32 : i32 to vector<1x128xi32>
      %40 = arith.addi %27, %39 : vector<1x128xi32>
      %41 = vector.broadcast %40 : vector<1x128xi32> to vector<256x128xi32>
      %42 = arith.cmpi eq, %28, %41 : vector<256x128xi32>
      %c17_i32 = arith.constant 17 : i32
      %43 = vector.broadcast %c17_i32 : i32 to vector<1x128xi32>
      %44 = arith.addi %27, %43 : vector<1x128xi32>
      %45 = vector.broadcast %44 : vector<1x128xi32> to vector<256x128xi32>
      %46 = arith.cmpi eq, %28, %45 : vector<256x128xi32>
      %cst = arith.constant 0.000000e+00 : f32
      %47 = vector.shape_cast %32 : vector<1x128xf32> to vector<1x128xf32>
      %48 = vector.broadcast %47 : vector<1x128xf32> to vector<256x128xf32>
      %49 = vector.broadcast %cst : f32 to vector<256x128xf32>
      %50 = arith.select %46, %48, %49 : vector<256x128xi1>, vector<256x128xf32>
      %51 = vector.shape_cast %31 : vector<1x128xf32> to vector<1x128xf32>
      %52 = vector.broadcast %51 : vector<1x128xf32> to vector<256x128xf32>
      %53 = arith.select %42, %52, %50 : vector<256x128xi1>, vector<256x128xf32>
      %54 = vector.shape_cast %30 : vector<1x128xf32> to vector<1x128xf32>
      %55 = vector.broadcast %54 : vector<1x128xf32> to vector<256x128xf32>
      %56 = arith.select %38, %55, %53 : vector<256x128xi1>, vector<256x128xf32>
      %57 = vector.shape_cast %29 : vector<1x128xf32> to vector<1x128xf32>
      %58 = vector.broadcast %57 : vector<1x128xf32> to vector<256x128xf32>
      %59 = arith.select %34, %58, %56 : vector<256x128xi1>, vector<256x128xf32>
      %c0_15 = arith.constant 0 : index
      %c0_16 = arith.constant 0 : index
      %60 = vector.load %arg7[%c0_15, %c0_16] : memref<4x128xf32, #tpu.memory_space<vmem>>, vector<4x128xf32>
      %cst_17 = arith.constant dense<0.000000e+00> : vector<4x128xf32>
      %61 = tpu.matmul %24, %59, %cst_17 {dimension_numbers = #tpu.dot_dimension_numbers<[1], [0], [0], [1], [0, 0, 1, 1], [], []>} : vector<4x256xf32>, vector<256x128xf32>, vector<4x128xf32> -> vector<4x128xf32>
      %62 = arith.addf %60, %61 : vector<4x128xf32>
      %c0_18 = arith.constant 0 : index
      %c0_19 = arith.constant 0 : index
      %63 = vector.load %arg7[%c0_18, %c0_19] : memref<4x128xf32, #tpu.memory_space<vmem>>, vector<4x128xf32>
      tpu.vector_store %arg7[%c0_18, %c0_19], %62 {strides = array<i32>} : memref<4x128xf32, #tpu.memory_space<vmem>>, vector<4x128xf32>,
    } else {
    }
    %c0_i32_4 = arith.constant 0 : i32
    %19 = arith.cmpi eq, %arg2, %c0_i32_4 : i32
    %20 = arith.extui %19 : i1 to i32
    %c0_i32_5 = arith.constant 0 : i32
    %21 = arith.cmpi ne, %20, %c0_i32_5 : i32
    scf.if %21 {
      %c0 = arith.constant 0 : index
      %c0_6 = arith.constant 0 : index
      %22 = vector.load %arg7[%c0, %c0_6] : memref<4x128xf32, #tpu.memory_space<vmem>>, vector<4x128xf32>
      %c0_7 = arith.constant 0 : index
      %c0_8 = arith.constant 0 : index
      %c0_9 = arith.constant 0 : index
      %23 = vector.load %arg6[%c0_7, %c0_8, %c0_9] : memref<1x4x128xf32, #tpu.memory_space<vmem>>, vector<1x4x128xf32>
      %24 = vector.shape_cast %23 : vector<1x4x128xf32> to vector<4x128xf32>
      %25 = vector.shape_cast %22 : vector<4x128xf32> to vector<1x4x128xf32>
      tpu.vector_store %arg6[%c0_7, %c0_8, %c0_9], %25 {strides = array<i32>} : memref<1x4x128xf32, #tpu.memory_space<vmem>>, vector<1x4x128xf32>,
    } else {
    }
    return
  }
  func.func @transform_0(%arg0: i32, %arg1: i32, %arg2: i32, %arg3: memref<4xi32, #tpu.memory_space<smem>>) -> (i32, i32, i32) {
    %c0_i32 = arith.constant 0 : i32
    %c0_i32_0 = arith.constant 0 : i32
    return %arg0, %c0_i32, %arg1 : i32, i32, i32
  }
  func.func @transform_1(%arg0: i32, %arg1: i32, %arg2: i32, %arg3: memref<4xi32, #tpu.memory_space<smem>>) -> (i32, i32, i32) {
    %c0_i32 = arith.constant 0 : i32
    %c0_i32_0 = arith.constant 0 : i32
    %c0_i32_1 = arith.constant 0 : i32
    return %arg0, %c0_i32, %c0_i32_0 : i32, i32, i32
  }
  func.func @transform_2(%arg0: i32, %arg1: i32, %arg2: i32, %arg3: memref<4xi32, #tpu.memory_space<smem>>) -> (i32, i32, i32) {
    %c0_i32 = arith.constant 0 : i32
    %c0_i32_0 = arith.constant 0 : i32
    return %arg0, %c0_i32, %arg1 : i32, i32, i32
  }
}

</mosaic_0001>

<llo_original>
// kernel: tpu_custom_call.1
$region0: #{tpu_custom_call.1}
  #allocation0 [shape = 'u32[]', space=smem, size = 0x4, offset = 0x4, fixed_abs, tag = 'smem constant byte address 0x4 - core index']
  #allocation1 [shape = 'u32[144,128]{1,0:T(1,128)}', space=vmem, size = 0x12000, scoped, tag = 'internal scratch']
  #allocation2 [shape = 'f32[4,128]{1,0:T(4,128)}', space=vmem, size = 0x800, scoped, tag = 'scratch operand']
  #allocation3 [shape = 's32[1,128]{1,0:T(1,128)}', space=vmem, size = 0x200, scoped, tag = 'scratch operand']
  #allocation4 [shape = 'f32[4,128]{1,0:T(4,128)}', space=vmem, size = 0x800, scoped, tag = 'scratch operand']
  #allocation5 [shape = 's32[1]{0}', space=sflag, size = 0x4, scoped, tag = 'scoped memory for tpu_custom_call.1']
  #allocation6 [shape = 'u8[512]{0}', space=smem, size = 0x200, scoped, tag = 'prefetched SMEM operand 0']
  %s0 = inlined_call_operand.hbm [shape: s32[4], index: 0, kind: input, shape index: {}]
  %s1 = inlined_call_operand.hbm [shape: f32[2,2,128], index: 1, kind: input, shape index: {}]
  %s2 = inlined_call_operand.hbm [shape: f32[2,4,256], index: 2, kind: input, shape index: {}]
  %s3 = inlined_call_operand.hbm [shape: f32[2,4,128], index: 3, kind: output, shape index: {}]
  %s4 = sld [smem:[#allocation0]]
  $region61: #{tpu_custom_call.1} parent=0
    _
  %s6 = ssub.s32 1, %s4
  %s7 = scalar_select 0, %s6, %s4
  %9 = dma.hbm_to_smem %s0, 16, [#allocation6], [#allocation5]
  %10 = dma.done [#allocation5], 16
  %11 = sfence
  $region1: #{tpu_custom_call.1} parent=0
    #allocation7 [shape = 'u8[2048]{0}', space=vmem, size = 0x800, scoped, tag = 'input window, operand 1']
    #allocation8 [shape = 's32[2]{0}', space=sflag, size = 0x8, scoped, tag = 'scoped memory for tpu_custom_call.1']
    #allocation9 [shape = 's32[2]{0}', space=sflag, size = 0x8, scoped, tag = 'scoped memory for tpu_custom_call.1']
    #allocation10 [shape = 'u8[8192]{0}', space=vmem, size = 0x2000, scoped, tag = 'input window, operand 2']
    #allocation11 [shape = 's32[2]{0}', space=sflag, size = 0x8, scoped, tag = 'scoped memory for tpu_custom_call.1']
    #allocation12 [shape = 'u8[4096]{0}', space=vmem, size = 0x1000, scoped, tag = 'output window, operand 0']
    %12 = vsyncpa [#allocation8], 0
    %s13 = scalar_lea.sflag [#allocation8], 1
    %14 = vsyncpa %s13, 0
    %15 = vsyncpa [#allocation11], 0
    %s16 = scalar_lea.sflag [#allocation11], 1
    %17 = vsyncpa %s16, 0
    %18 = vsyncpa [#allocation9], 0
    %s19 = scalar_lea.sflag [#allocation9], 1
    %20 = vsyncpa %s19, 0
    loop: start=0, step=1, limit=4
    $region2: #{tpu_custom_call.1} parent=1 // loop_pre_header
      _
    $region3: #{tpu_custom_call.1} parent=1 // loop_header
      %s22 = sphi 0, %s26
      %p23 = scmp.ge.s32.totalorder %s22, 4
      %s29 = sphi 0, %s48
      %s30 = sphi 0, %s44
      %s31 = sphi 0, %s40
      %s32 = sphi 0, %s29
      %s33 = sphi 0, %s30
      %s34 = sphi 0, %s31
      %s35 = sphi 0, %s32
      %s36 = sphi 0, %s33
      %s37 = sphi 0, %s34
      %s53 = sphi 0, %s55
      %s56 = sphi 0, %s53
      %s57 = sphi 0, %s56
      %s73 = sphi 0, %s57
      %s79 = sphi 0, %s81
      %s82 = sphi 0, %s79
      %s83 = sphi 0, %s82
      %s99 = sphi 0, %s83
      %s107 = sphi 0, %s109
      %s110 = sphi 0, %s107
      %s111 = sphi 0, %s110
      %s127 = sphi 0, %s111
    $region4: #{tpu_custom_call.1} parent=1 // loop_header_branch
      %25 = sbr.rel (%p23) target = $region8
    $region5: #{tpu_custom_call.1} parent=1 // loop_body
      %s27 = ssub.s32 %s22, 1
      %s28 = ssub.s32 %s22, 2
      %s38 = sadd.s32 1, %s31
      %p39 = scmp.ge.s32.totalorder %s38, 1
      %s40 = scalar_select %p39, 0, %s38
      %s41 = sadd.s32 1, %s30
      %s42 = scalar_select %p39, %s41, %s30
      %p43 = scmp.ge.s32.totalorder %s42, 1
      %s44 = scalar_select %p43, 0, %s42
      %s45 = sadd.s32 1, %s29
      %s46 = scalar_select %p43, %s45, %s29
      %p47 = scmp.ge.s32.totalorder %s46, 2
      %s48 = scalar_select %p47, 0, %s46
      %s49 = ssub.s32 %s29, %s48
      %s50 = ssub.s32 %s30, %s44
      %s51 = sor.u32 %s49, %s50
      %p52 = scmp.eq.s32.totalorder %s51, 0
      %s54 = sadd.s32 %s53, 1
      %s55 = scalar_select %p52, %s53, %s54
      %p58 = pneg %p52
      %p59 = scmp.eq.s32.totalorder %s22, 1
      %p60 = por %p58, %p59
      %p61 = scmp.ne.s32.totalorder %s53, %s56
      %p62 = scmp.eq.s32.totalorder %s22, 0
      %p63 = por %p61, %p62
      %p64 = scmp.ne.s32.totalorder %s53, %s56
      %p65 = scmp.eq.s32.totalorder %s27, 1
      %p66 = por %p64, %p65
      %p67 = scmp.ne.s32.totalorder %s56, %s57
      %p68 = scmp.eq.s32.totalorder %s27, 0
      %p69 = por %p67, %p68
      %p70 = scmp.ne.s32.totalorder %s56, %s57
      %p71 = scmp.eq.s32.totalorder %s28, 1
      %p72 = por %p70, %p71
      %p74 = scmp.ne.s32.totalorder %s57, %s73
      %p75 = scmp.eq.s32.totalorder %s28, 0
      %p76 = por %p74, %p75
      %s77 = ssub.s32 %s29, %s48
      %p78 = scmp.eq.s32.totalorder %s77, 0
      %s80 = sadd.s32 %s79, 1
      %s81 = scalar_select %p78, %s79, %s80
      %p84 = pneg %p78
      %p85 = scmp.eq.s32.totalorder %s22, 1
      %p86 = por %p84, %p85
      %p87 = scmp.ne.s32.totalorder %s79, %s82
      %p88 = scmp.eq.s32.totalorder %s22, 0
      %p89 = por %p87, %p88
      %p90 = scmp.ne.s32.totalorder %s79, %s82
      %p91 = scmp.eq.s32.totalorder %s27, 1
      %p92 = por %p90, %p91
      %p93 = scmp.ne.s32.totalorder %s82, %s83
      %p94 = scmp.eq.s32.totalorder %s27, 0
      %p95 = por %p93, %p94
      %p96 = scmp.ne.s32.totalorder %s82, %s83
      %p97 = scmp.eq.s32.totalorder %s28, 1
      %p98 = por %p96, %p97
      %p100 = scmp.ne.s32.totalorder %s83, %s99
      %p101 = scmp.eq.s32.totalorder %s28, 0
      %p102 = por %p100, %p101
      %s103 = ssub.s32 %s29, %s48
      %s104 = ssub.s32 %s30, %s44
      %s105 = sor.u32 %s103, %s104
      %p106 = scmp.eq.s32.totalorder %s105, 0
      %s108 = sadd.s32 %s107, 1
      %s109 = scalar_select %p106, %s107, %s108
      %p112 = pneg %p106
      %p113 = scmp.eq.s32.totalorder %s22, 1
      %p114 = por %p112, %p113
      %p115 = scmp.ne.s32.totalorder %s107, %s110
      %p116 = scmp.eq.s32.totalorder %s22, 0
      %p117 = por %p115, %p116
      %p118 = scmp.ne.s32.totalorder %s107, %s110
      %p119 = scmp.eq.s32.totalorder %s27, 1
      %p120 = por %p118, %p119
      %p121 = scmp.ne.s32.totalorder %s110, %s111
      %p122 = scmp.eq.s32.totalorder %s27, 0
      %p123 = por %p121, %p122
      %p124 = scmp.ne.s32.totalorder %s110, %s111
      %p125 = scmp.eq.s32.totalorder %s28, 1
      %p126 = por %p124, %p125
      %p128 = scmp.ne.s32.totalorder %s111, %s127
      %p129 = scmp.eq.s32.totalorder %s28, 0
      %p130 = por %p128, %p129
      %p131 = scmp.le.s32.totalorder 1, %s22
      %p132 = scmp.lt.s32.totalorder %s22, 3
      %p133 = pnand %p131, %p132
      %p134 = pneg %p133
      // Predicated region
      $region9: #{tpu_custom_call.1} parent=5 // pred_check
        _
      $region10: #{tpu_custom_call.1} parent=5 // pred_check_branch
        %136 = sbr.rel (%p133) target = $region12
      $region11: #{tpu_custom_call.1} parent=5 // pred_region
        %s137 = ssub.s32 %s22, 1
      $region12: #{tpu_custom_call.1} parent=5 // pred_fallthru
        _
      %p138 = scmp.lt.s32.totalorder %s22, 2
      // Predicated region
      $region13: #{tpu_custom_call.1} parent=5 // pred_check
        %p139 = pneg %p138
      $region14: #{tpu_custom_call.1} parent=5 // pred_check_branch
        %141 = sbr.rel (%p139) target = $region16
      $region15: #{tpu_custom_call.1} parent=5 // pred_region
        // Predicated region
        $region17: #{tpu_custom_call.1} parent=15 // pred_check
          %p142 = pneg %p63
        $region18: #{tpu_custom_call.1} parent=15 // pred_check_branch
          %144 = sbr.rel (%p142) target = $region20
        $region19: #{tpu_custom_call.1} parent=15 // pred_region
          %s145 = sand.u32 %s53, 1
          %s146 = scalar_lea.sflag [#allocation8], %s145
          %s147 = sand.u32 %s53, 1
          %s148 = smul.addr %s147, 2
          %s149 = scalar_lea.vmem [#allocation7], %s148
          %s151 = ssub.s32 32, 32
          %152 = vsyncadd %s146, %s151
          %s153 = sadd.s32 %s30, %s29
          %s154 = smul.addr %s153, 32
          %s155 = scalar_lea.hbm %s1, %s154
          %s157 = sshll.u32 %s149, 4
          %s158 = int_to_ptr.vmem [resolvable:$true] %s157
          %160 = dma.hbm_to_vmem [thread:$0]  %s155, 32, %s158, %s146
        $region20: #{tpu_custom_call.1} parent=15 // pred_fallthru
          _
        // Predicated region
        $region21: #{tpu_custom_call.1} parent=15 // pred_check
          %p161 = pneg %p89
        $region22: #{tpu_custom_call.1} parent=15 // pred_check_branch
          %163 = sbr.rel (%p161) target = $region24
        $region23: #{tpu_custom_call.1} parent=15 // pred_region
          %s164 = sand.u32 %s79, 1
          %s165 = scalar_lea.sflag [#allocation11], %s164
          %s166 = sand.u32 %s79, 1
          %s167 = smul.addr %s166, 8
          %s168 = scalar_lea.vmem [#allocation10], %s167
          %s170 = ssub.s32 128, 128
          %171 = vsyncadd %s165, %s170
          %s172 = smul.addr %s29, 2
          %s173 = smul.addr %s172, 64
          %s174 = scalar_lea.hbm %s2, %s173
          %s176 = sshll.u32 %s168, 4
          %s177 = int_to_ptr.vmem [resolvable:$true] %s176
          %179 = dma.hbm_to_vmem [thread:$0]  %s174, 128, %s177, %s165
        $region24: #{tpu_custom_call.1} parent=15 // pred_fallthru
          _
      $region16: #{tpu_custom_call.1} parent=5 // pred_fallthru
        _
      %p180 = scmp.le.s32.totalorder 1, %s22
      %p181 = scmp.lt.s32.totalorder %s22, 3
      %p182 = pnand %p180, %p181
      %p183 = pneg %p182
      // Predicated region
      $region25: #{tpu_custom_call.1} parent=5 // pred_check
        _
      $region26: #{tpu_custom_call.1} parent=5 // pred_check_branch
        %185 = sbr.rel (%p182) target = $region28
      $region27: #{tpu_custom_call.1} parent=5 // pred_region
        %s186 = ssub.s32 %s22, 1
        %s187 = sand.u32 %s56, 1
        %s188 = scalar_lea.sflag [#allocation8], %s187
        %s189 = sand.u32 %s56, 1
        %s190 = smul.addr %s189, 2
        %s191 = scalar_lea.vmem [#allocation7], %s190
        // Predicated region
        $region29: #{tpu_custom_call.1} parent=27 // pred_check
          %p192 = pneg %p69
        $region30: #{tpu_custom_call.1} parent=27 // pred_check_branch
          %194 = sbr.rel (%p192) target = $region32
        $region31: #{tpu_custom_call.1} parent=27 // pred_region
          %195 = dma.done %s188, 32
        $region32: #{tpu_custom_call.1} parent=27 // pred_fallthru
          _
        %s196 = sand.u32 %s82, 1
        %s197 = scalar_lea.sflag [#allocation11], %s196
        %s198 = sand.u32 %s82, 1
        %s199 = smul.addr %s198, 8
        %s200 = scalar_lea.vmem [#allocation10], %s199
        // Predicated region
        $region33: #{tpu_custom_call.1} parent=27 // pred_check
          %p201 = pneg %p95
        $region34: #{tpu_custom_call.1} parent=27 // pred_check_branch
          %203 = sbr.rel (%p201) target = $region36
        $region35: #{tpu_custom_call.1} parent=27 // pred_region
          %204 = dma.done %s197, 128
        $region36: #{tpu_custom_call.1} parent=27 // pred_fallthru
          _
        %s205 = sand.u32 %s56, 1
        %s206 = scalar_lea.sflag [#allocation8], %s205
        %s207 = sand.u32 %s56, 1
        %s208 = smul.addr %s207, 2
        %s209 = scalar_lea.vmem [#allocation7], %s208
        %p210 = pneg %p69
        %p211 = pneg %p66
        %s212 = sand.u32 %s82, 1
        %s213 = scalar_lea.sflag [#allocation11], %s212
        %s214 = sand.u32 %s82, 1
        %s215 = smul.addr %s214, 8
        %s216 = scalar_lea.vmem [#allocation10], %s215
        %p217 = pneg %p95
        %p218 = pneg %p92
        %p219 = pneg %p123
        %p220 = pneg %p120
        %s221 = sand.u32 %s110, 1
        %s222 = scalar_lea.sflag [#allocation9], %s221
        %s223 = sand.u32 %s110, 1
        %s224 = smul.addr %s223, 4
        %s225 = scalar_lea.vmem [#allocation12], %s224
        %p226 = scmp.eq.s32.totalorder %s34, 0
        // Predicated region
        $region37: #{tpu_custom_call.1} parent=27 // pred_check
          %p227 = pneg %p226
        $region38: #{tpu_custom_call.1} parent=27 // pred_check_branch
          %229 = sbr.rel (%p227) target = $region40
        $region39: #{tpu_custom_call.1} parent=27 // pred_region
          %230 = vst [vmem:[#allocation2] sm:$0xf] 0.0
          %v231 = vld [vmem:[%s191] sm:$0x3]
          %v232 = vadd.f32 %v231, 1.0
          %v233 = vmul.f32 %v232, 7.5
          %v234 = vfloor.f32 %v233
          %v235 = vsub.f32 %v233, %v234
          %v236 = vsub.f32 1.0, %v235
          %vm237 = vcmp.ge.f32.partialorder %v234, 0.0
          %vm238 = vcmp.le.f32.partialorder %v234, 15.0
          %vm239 = vmand %vm237, %vm238
          %v240 = vsel %vm239, 1, 0
          %v241 = vcvt.s32.f32 %v240
          %vm242 = vcmp.ge.f32.partialorder %v234, -1.0
          %vm243 = vcmp.le.f32.partialorder %v234, 14.0
          %vm244 = vmand %vm242, %vm243
          %v245 = vsel %vm244, 1, 0
          %v246 = vcvt.s32.f32 %v245
          %v248 = vrot.slane %v236, 1
          %v250 = vmul.f32 %v236, %v248
          %v251 = vmul.f32 %v250, %v241
          %v253 = vrot.slane %v241, 1
          %v255 = vmul.f32 %v251, %v253
          %256 = vst [vmem:[#allocation4] sm:$0x1] %v255
          %v257 = vmul.f32 %v235, %v248
          %v258 = vmul.f32 %v257, %v246
          %v259 = vmul.f32 %v258, %v253
          %260 = vst [vmem:[#allocation4 + $0x1] sm:$0x1] %v259
          %v262 = vrot.slane %v235, 1
          %v264 = vmul.f32 %v236, %v262
          %v265 = vmul.f32 %v264, %v241
          %v267 = vrot.slane %v246, 1
          %v269 = vmul.f32 %v265, %v267
          %270 = vst [vmem:[#allocation4 + $0x2] sm:$0x1] %v269
          %v271 = vmul.f32 %v235, %v262
          %v272 = vmul.f32 %v271, %v246
          %v273 = vmul.f32 %v272, %v267
          %274 = vst [vmem:[#allocation4 + $0x3] sm:$0x1] %v273
          %v275 = vcvt.f32.s32.to.zero.pseudo %v234
          %v276 = vmul.u32 %v275, 16
          %v277 = vrot.slane %v275, 7
          %v278 = vadd.s32 %v276, %v277
          %279 = vst [vmem:[#allocation3 - $0x1] sm:$0x2] %v278
        $region40: #{tpu_custom_call.1} parent=27 // pred_fallthru
          _
        %s280 = smul.u32 %s34, 256
        %s281 = sadd.s32 %s32, %s33
        %s282 = smul.u32 %s281, 2
        %s283 = sld [smem:[#allocation6 + %s282]]
        %s284 = sadd.s32 %s282, 1
        %s285 = sld [smem:[#allocation6 + %s284]]
        %p286 = scmp.le.s32.totalorder %s280, %s285
        %s287 = sadd.s32 %s280, 256
        %p288 = scmp.gt.s32.totalorder %s287, %s283
        %p289 = pnand %p286, %p288
        %p290 = pneg %p289
        // Predicated region
        $region41: #{tpu_custom_call.1} parent=27 // pred_check
          _
        $region42: #{tpu_custom_call.1} parent=27 // pred_check_branch
          %292 = sbr.rel (%p289) target = $region44
        $region43: #{tpu_custom_call.1} parent=27 // pred_region
          %s293 = sshra.s32 %s280, 7
          %s294 = sand.u32 %s280, 127
          %s295 = smul.addr %s293, 4
          %s296 = scalar_lea.vmem %s200, %s295 [#allocation10]
          %v297 = vld [vmem:[%s296] sm:$0xff]
          %v298 = vld [vmem:[#allocation3] sm:$0x1]
          %v299 = vstv %s280
          %v300 = vsub.s32 %v298, %v299
          %v301 = vlaneseq
          %v302 = vshrl.u32 %v301, 7
          %v303 = vadd.s32 %v302, 8
          %v304 = vadd.s32 %v302, 16
          %v305 = vadd.s32 %v302, 24
          %v306 = vadd.s32 %v302, 32
          %v307 = vadd.s32 %v302, 40
          %v308 = vadd.s32 %v302, 48
          %v309 = vadd.s32 %v302, 56
          %v310 = vadd.s32 %v302, 64
          %v311 = vadd.s32 %v302, 72
          %v312 = vadd.s32 %v302, 80
          %v313 = vadd.s32 %v302, 88
          %v314 = vadd.s32 %v302, 96
          %v315 = vadd.s32 %v302, 104
          %v316 = vadd.s32 %v302, 112
          %v317 = vadd.s32 %v302, 120
          %v318 = vadd.s32 %v302, 128
          %v319 = vadd.s32 %v302, 136
          %v320 = vadd.s32 %v302, 144
          %v321 = vadd.s32 %v302, 152
          %v322 = vadd.s32 %v302, 160
          %v323 = vadd.s32 %v302, 168
          %v324 = vadd.s32 %v302, 176
          %v325 = vadd.s32 %v302, 184
          %v326 = vadd.s32 %v302, 192
          %v327 = vadd.s32 %v302, 200
          %v328 = vadd.s32 %v302, 208
          %v329 = vadd.s32 %v302, 216
          %v330 = vadd.s32 %v302, 224
          %v331 = vadd.s32 %v302, 232
          %v332 = vadd.s32 %v302, 240
          %v333 = vadd.s32 %v302, 248
          %v334 = vld [vmem:[#allocation4] sm:$0x1]
          %v335 = vld [vmem:[#allocation4 + $0x1] sm:$0x1]
          %v336 = vld [vmem:[#allocation4 + $0x2] sm:$0x1]
          %v337 = vld [vmem:[#allocation4 + $0x3] sm:$0x1]
          %v338 = vlaneseq
          %v339 = vshrl.u32 %v338, 7
          %v340 = vsub.s32 0, %v339
          %v341 = vrot.slane %v300, %v340
          %vm342 = vcmp.eq.s32.totalorder %v302, %v341
          %vm343 = vcmp.eq.s32.totalorder %v303, %v341
          %vm344 = vcmp.eq.s32.totalorder %v304, %v341
          %vm345 = vcmp.eq.s32.totalorder %v305, %v341
          %vm346 = vcmp.eq.s32.totalorder %v306, %v341
          %vm347 = vcmp.eq.s32.totalorder %v307, %v341
          %vm348 = vcmp.eq.s32.totalorder %v308, %v341
          %vm349 = vcmp.eq.s32.totalorder %v309, %v341
          %vm350 = vcmp.eq.s32.totalorder %v310, %v341
          %vm351 = vcmp.eq.s32.totalorder %v311, %v341
          %vm352 = vcmp.eq.s32.totalorder %v312, %v341
          %vm353 = vcmp.eq.s32.totalorder %v313, %v341
          %vm354 = vcmp.eq.s32.totalorder %v314, %v341
          %vm355 = vcmp.eq.s32.totalorder %v315, %v341
          %vm356 = vcmp.eq.s32.totalorder %v316, %v341
          %vm357 = vcmp.eq.s32.totalorder %v317, %v341
          %vm358 = vcmp.eq.s32.totalorder %v318, %v341
          %vm359 = vcmp.eq.s32.totalorder %v319, %v341
          %vm360 = vcmp.eq.s32.totalorder %v320, %v341
          %vm361 = vcmp.eq.s32.totalorder %v321, %v341
          %vm362 = vcmp.eq.s32.totalorder %v322, %v341
          %vm363 = vcmp.eq.s32.totalorder %v323, %v341
          %vm364 = vcmp.eq.s32.totalorder %v324, %v341
          %vm365 = vcmp.eq.s32.totalorder %v325, %v341
          %vm366 = vcmp.eq.s32.totalorder %v326, %v341
          %vm367 = vcmp.eq.s32.totalorder %v327, %v341
          %vm368 = vcmp.eq.s32.totalorder %v328, %v341
          %vm369 = vcmp.eq.s32.totalorder %v329, %v341
          %vm370 = vcmp.eq.s32.totalorder %v330, %v341
          %vm371 = vcmp.eq.s32.totalorder %v331, %v341
          %vm372 = vcmp.eq.s32.totalorder %v332, %v341
          %vm373 = vcmp.eq.s32.totalorder %v333, %v341
          %v374 = vadd.s32 %v300, 1
          %v375 = vlaneseq
          %v376 = vshrl.u32 %v375, 7
          %v377 = vsub.s32 0, %v376
          %v378 = vrot.slane %v374, %v377
          %vm379 = vcmp.eq.s32.totalorder %v302, %v378
          %vm380 = vcmp.eq.s32.totalorder %v303, %v378
          %vm381 = vcmp.eq.s32.totalorder %v304, %v378
          %vm382 = vcmp.eq.s32.totalorder %v305, %v378
          %vm383 = vcmp.eq.s32.totalorder %v306, %v378
          %vm384 = vcmp.eq.s32.totalorder %v307, %v378
          %vm385 = vcmp.eq.s32.totalorder %v308, %v378
          %vm386 = vcmp.eq.s32.totalorder %v309, %v378
          %vm387 = vcmp.eq.s32.totalorder %v310, %v378
          %vm388 = vcmp.eq.s32.totalorder %v311, %v378
          %vm389 = vcmp.eq.s32.totalorder %v312, %v378
          %vm390 = vcmp.eq.s32.totalorder %v313, %v378
          %vm391 = vcmp.eq.s32.totalorder %v314, %v378
          %vm392 = vcmp.eq.s32.totalorder %v315, %v378
          %vm393 = vcmp.eq.s32.totalorder %v316, %v378
          %vm394 = vcmp.eq.s32.totalorder %v317, %v378
          %vm395 = vcmp.eq.s32.totalorder %v318, %v378
          %vm396 = vcmp.eq.s32.totalorder %v319, %v378
          %vm397 = vcmp.eq.s32.totalorder %v320, %v378
          %vm398 = vcmp.eq.s32.totalorder %v321, %v378
          %vm399 = vcmp.eq.s32.totalorder %v322, %v378
          %vm400 = vcmp.eq.s32.totalorder %v323, %v378
          %vm401 = vcmp.eq.s32.totalorder %v324, %v378
          %vm402 = vcmp.eq.s32.totalorder %v325, %v378
          %vm403 = vcmp.eq.s32.totalorder %v326, %v378
          %vm404 = vcmp.eq.s32.totalorder %v327, %v378
          %vm405 = vcmp.eq.s32.totalorder %v328, %v378
          %vm406 = vcmp.eq.s32.totalorder %v329, %v378
          %vm407 = vcmp.eq.s32.totalorder %v330, %v378
          %vm408 = vcmp.eq.s32.totalorder %v331, %v378
          %vm409 = vcmp.eq.s32.totalorder %v332, %v378
          %vm410 = vcmp.eq.s32.totalorder %v333, %v378
          %v411 = vadd.s32 %v300, 16
          %v412 = vlaneseq
          %v413 = vshrl.u32 %v412, 7
          %v414 = vsub.s32 0, %v413
          %v415 = vrot.slane %v411, %v414
          %vm416 = vcmp.eq.s32.totalorder %v302, %v415
          %vm417 = vcmp.eq.s32.totalorder %v303, %v415
          %vm418 = vcmp.eq.s32.totalorder %v304, %v415
          %vm419 = vcmp.eq.s32.totalorder %v305, %v415
          %vm420 = vcmp.eq.s32.totalorder %v306, %v415
          %vm421 = vcmp.eq.s32.totalorder %v307, %v415
          %vm422 = vcmp.eq.s32.totalorder %v308, %v415
          %vm423 = vcmp.eq.s32.totalorder %v309, %v415
          %vm424 = vcmp.eq.s32.totalorder %v310, %v415
          %vm425 = vcmp.eq.s32.totalorder %v311, %v415
          %vm426 = vcmp.eq.s32.totalorder %v312, %v415
          %vm427 = vcmp.eq.s32.totalorder %v313, %v415
          %vm428 = vcmp.eq.s32.totalorder %v314, %v415
          %vm429 = vcmp.eq.s32.totalorder %v315, %v415
          %vm430 = vcmp.eq.s32.totalorder %v316, %v415
          %vm431 = vcmp.eq.s32.totalorder %v317, %v415
          %vm432 = vcmp.eq.s32.totalorder %v318, %v415
          %vm433 = vcmp.eq.s32.totalorder %v319, %v415
          %vm434 = vcmp.eq.s32.totalorder %v320, %v415
          %vm435 = vcmp.eq.s32.totalorder %v321, %v415
          %vm436 = vcmp.eq.s32.totalorder %v322, %v415
          %vm437 = vcmp.eq.s32.totalorder %v323, %v415
          %vm438 = vcmp.eq.s32.totalorder %v324, %v415
          %vm439 = vcmp.eq.s32.totalorder %v325, %v415
          %vm440 = vcmp.eq.s32.totalorder %v326, %v415
          %vm441 = vcmp.eq.s32.totalorder %v327, %v415
          %vm442 = vcmp.eq.s32.totalorder %v328, %v415
          %vm443 = vcmp.eq.s32.totalorder %v329, %v415
          %vm444 = vcmp.eq.s32.totalorder %v330, %v415
          %vm445 = vcmp.eq.s32.totalorder %v331, %v415
          %vm446 = vcmp.eq.s32.totalorder %v332, %v415
          %vm447 = vcmp.eq.s32.totalorder %v333, %v415
          %v448 = vadd.s32 %v300, 17
          %v449 = vlaneseq
          %v450 = vshrl.u32 %v449, 7
          %v451 = vsub.s32 0, %v450
          %v452 = vrot.slane %v448, %v451
          %vm453 = vcmp.eq.s32.totalorder %v302, %v452
          %vm454 = vcmp.eq.s32.totalorder %v303, %v452
          %vm455 = vcmp.eq.s32.totalorder %v304, %v452
          %vm456 = vcmp.eq.s32.totalorder %v305, %v452
          %vm457 = vcmp.eq.s32.totalorder %v306, %v452
          %vm458 = vcmp.eq.s32.totalorder %v307, %v452
          %vm459 = vcmp.eq.s32.totalorder %v308, %v452
          %vm460 = vcmp.eq.s32.totalorder %v309, %v452
          %vm461 = vcmp.eq.s32.totalorder %v310, %v452
          %vm462 = vcmp.eq.s32.totalorder %v311, %v452
          %vm463 = vcmp.eq.s32.totalorder %v312, %v452
          %vm464 = vcmp.eq.s32.totalorder %v313, %v452
          %vm465 = vcmp.eq.s32.totalorder %v314, %v452
          %vm466 = vcmp.eq.s32.totalorder %v315, %v452
          %vm467 = vcmp.eq.s32.totalorder %v316, %v452
          %vm468 = vcmp.eq.s32.totalorder %v317, %v452
          %vm469 = vcmp.eq.s32.totalorder %v318, %v452
          %vm470 = vcmp.eq.s32.totalorder %v319, %v452
          %vm471 = vcmp.eq.s32.totalorder %v320, %v452
          %vm472 = vcmp.eq.s32.totalorder %v321, %v452
          %vm473 = vcmp.eq.s32.totalorder %v322, %v452
          %vm474 = vcmp.eq.s32.totalorder %v323, %v452
          %vm475 = vcmp.eq.s32.totalorder %v324, %v452
          %vm476 = vcmp.eq.s32.totalorder %v325, %v452
          %vm477 = vcmp.eq.s32.totalorder %v326, %v452
          %vm478 = vcmp.eq.s32.totalorder %v327, %v452
          %vm479 = vcmp.eq.s32.totalorder %v328, %v452
          %vm480 = vcmp.eq.s32.totalorder %v329, %v452
          %vm481 = vcmp.eq.s32.totalorder %v330, %v452
          %vm482 = vcmp.eq.s32.totalorder %v331, %v452
          %vm483 = vcmp.eq.s32.totalorder %v332, %v452
          %vm484 = vcmp.eq.s32.totalorder %v333, %v452
          %v485 = vlaneseq
          %v486 = vshrl.u32 %v485, 7
          %v487 = vsub.s32 0, %v486
          %v488 = vrot.slane %v337, %v487
          %v489 = vsel %vm453, %v488, 0.0
          %v490 = vsel %vm454, %v488, 0.0
          %v491 = vsel %vm455, %v488, 0.0
          %v492 = vsel %vm456, %v488, 0.0
          %v493 = vsel %vm457, %v488, 0.0
          %v494 = vsel %vm458, %v488, 0.0
          %v495 = vsel %vm459, %v488, 0.0
          %v496 = vsel %vm460, %v488, 0.0
          %v497 = vsel %vm461, %v488, 0.0
          %v498 = vsel %vm462, %v488, 0.0
          %v499 = vsel %vm463, %v488, 0.0
          %v500 = vsel %vm464, %v488, 0.0
          %v501 = vsel %vm465, %v488, 0.0
          %v502 = vsel %vm466, %v488, 0.0
          %v503 = vsel %vm467, %v488, 0.0
          %v504 = vsel %vm468, %v488, 0.0
          %v505 = vsel %vm469, %v488, 0.0
          %v506 = vsel %vm470, %v488, 0.0
          %v507 = vsel %vm471, %v488, 0.0
          %v508 = vsel %vm472, %v488, 0.0
          %v509 = vsel %vm473, %v488, 0.0
          %v510 = vsel %vm474, %v488, 0.0
          %v511 = vsel %vm475, %v488, 0.0
          %v512 = vsel %vm476, %v488, 0.0
          %v513 = vsel %vm477, %v488, 0.0
          %v514 = vsel %vm478, %v488, 0.0
          %v515 = vsel %vm479, %v488, 0.0
          %v516 = vsel %vm480, %v488, 0.0
          %v517 = vsel %vm481, %v488, 0.0
          %v518 = vsel %vm482, %v488, 0.0
          %v519 = vsel %vm483, %v488, 0.0
          %v520 = vsel %vm484, %v488, 0.0
          %v521 = vlaneseq
          %v522 = vshrl.u32 %v521, 7
          %v523 = vsub.s32 0, %v522
          %v524 = vrot.slane %v336, %v523
          %v525 = vsel %vm416, %v524, %v489
          %v526 = vsel %vm417, %v524, %v490
          %v527 = vsel %vm418, %v524, %v491
          %v528 = vsel %vm419, %v524, %v492
          %v529 = vsel %vm420, %v524, %v493
          %v530 = vsel %vm421, %v524, %v494
          %v531 = vsel %vm422, %v524, %v495
          %v532 = vsel %vm423, %v524, %v496
          %v533 = vsel %vm424, %v524, %v497
          %v534 = vsel %vm425, %v524, %v498
          %v535 = vsel %vm426, %v524, %v499
          %v536 = vsel %vm427, %v524, %v500
          %v537 = vsel %vm428, %v524, %v501
          %v538 = vsel %vm429, %v524, %v502
          %v539 = vsel %vm430, %v524, %v503
          %v540 = vsel %vm431, %v524, %v504
          %v541 = vsel %vm432, %v524, %v505
          %v542 = vsel %vm433, %v524, %v506
          %v543 = vsel %vm434, %v524, %v507
          %v544 = vsel %vm435, %v524, %v508
          %v545 = vsel %vm436, %v524, %v509
          %v546 = vsel %vm437, %v524, %v510
          %v547 = vsel %vm438, %v524, %v511
          %v548 = vsel %vm439, %v524, %v512
          %v549 = vsel %vm440, %v524, %v513
          %v550 = vsel %vm441, %v524, %v514
          %v551 = vsel %vm442, %v524, %v515
          %v552 = vsel %vm443, %v524, %v516
          %v553 = vsel %vm444, %v524, %v517
          %v554 = vsel %vm445, %v524, %v518
          %v555 = vsel %vm446, %v524, %v519
          %v556 = vsel %vm447, %v524, %v520
          %v557 = vlaneseq
          %v558 = vshrl.u32 %v557, 7
          %v559 = vsub.s32 0, %v558
          %v560 = vrot.slane %v335, %v559
          %v561 = vsel %vm379, %v560, %v525
          %v562 = vsel %vm380, %v560, %v526
          %v563 = vsel %vm381, %v560, %v527
          %v564 = vsel %vm382, %v560, %v528
          %v565 = vsel %vm383, %v560, %v529
          %v566 = vsel %vm384, %v560, %v530
          %v567 = vsel %vm385, %v560, %v531
          %v568 = vsel %vm386, %v560, %v532
          %v569 = vsel %vm387, %v560, %v533
          %v570 = vsel %vm388, %v560, %v534
          %v571 = vsel %vm389, %v560, %v535
          %v572 = vsel %vm390, %v560, %v536
          %v573 = vsel %vm391, %v560, %v537
          %v574 = vsel %vm392, %v560, %v538
          %v575 = vsel %vm393, %v560, %v539
          %v576 = vsel %vm394, %v560, %v540
          %v577 = vsel %vm395, %v560, %v541
          %v578 = vsel %vm396, %v560, %v542
          %v579 = vsel %vm397, %v560, %v543
          %v580 = vsel %vm398, %v560, %v544
          %v581 = vsel %vm399, %v560, %v545
          %v582 = vsel %vm400, %v560, %v546
          %v583 = vsel %vm401, %v560, %v547
          %v584 = vsel %vm402, %v560, %v548
          %v585 = vsel %vm403, %v560, %v549
          %v586 = vsel %vm404, %v560, %v550
          %v587 = vsel %vm405, %v560, %v551
          %v588 = vsel %vm406, %v560, %v552
          %v589 = vsel %vm407, %v560, %v553
          %v590 = vsel %vm408, %v560, %v554
          %v591 = vsel %vm409, %v560, %v555
          %v592 = vsel %vm410, %v560, %v556
          %v593 = vlaneseq
          %v594 = vshrl.u32 %v593, 7
          %v595 = vsub.s32 0, %v594
          %v596 = vrot.slane %v334, %v595
          %v597 = vsel %vm342, %v596, %v561
          %v598 = vsel %vm343, %v596, %v562
          %v599 = vsel %vm344, %v596, %v563
          %v600 = vsel %vm345, %v596, %v564
          %v601 = vsel %vm346, %v596, %v565
          %v602 = vsel %vm347, %v596, %v566
          %v603 = vsel %vm348, %v596, %v567
          %v604 = vsel %vm349, %v596, %v568
          %v605 = vsel %vm350, %v596, %v569
          %v606 = vsel %vm351, %v596, %v570
          %v607 = vsel %vm352, %v596, %v571
          %v608 = vsel %vm353, %v596, %v572
          %v609 = vsel %vm354, %v596, %v573
          %v610 = vsel %vm355, %v596, %v574
          %v611 = vsel %vm356, %v596, %v575
          %v612 = vsel %vm357, %v596, %v576
          %v613 = vsel %vm358, %v596, %v577
          %v614 = vsel %vm359, %v596, %v578
          %v615 = vsel %vm360, %v596, %v579
          %v616 = vsel %vm361, %v596, %v580
          %v617 = vsel %vm362, %v596, %v581
          %v618 = vsel %vm363, %v596, %v582
          %v619 = vsel %vm364, %v596, %v583
          %v620 = vsel %vm365, %v596, %v584
          %v621 = vsel %vm366, %v596, %v585
          %v622 = vsel %vm367, %v596, %v586
          %v623 = vsel %vm368, %v596, %v587
          %v624 = vsel %vm369, %v596, %v588
          %v625 = vsel %vm370, %v596, %v589
          %v626 = vsel %vm371, %v596, %v590
          %v627 = vsel %vm372, %v596, %v591
          %v628 = vsel %vm373, %v596, %v592
          %v629 = vld [vmem:[#allocation2] sm:$0xf]
          %v631 = vcombine.high %v297, %v297
          %633 = vmatprep.subr.mxu0 0.0
          %634 = vmatpush1.msra.mxu0 %v612
          %635 = vmatprep.subr.mxu0 0.0
          %636 = vmatpush1.msra.mxu0 %v611
          %637 = vmatprep.subr.mxu0 0.0
          %638 = vmatpush1.msra.mxu0 %v610
          %639 = vmatprep.subr.mxu0 0.0
          %640 = vmatpush1.msra.mxu0 %v609
          %641 = vmatprep.subr.mxu0 0.0
          %642 = vmatpush1.msra.mxu0 %v608
          %643 = vmatprep.subr.mxu0 0.0
          %644 = vmatpush1.msra.mxu0 %v607
          %645 = vmatprep.subr.mxu0 0.0
          %646 = vmatpush1.msra.mxu0 %v606
          %647 = vmatprep.subr.mxu0 0.0
          %648 = vmatpush1.msra.mxu0 %v605
          %649 = vmatprep.subr.mxu0 0.0
          %650 = vmatpush1.msra.mxu0 %v604
          %651 = vmatprep.subr.mxu0 0.0
          %652 = vmatpush1.msra.mxu0 %v603
          %653 = vmatprep.subr.mxu0 0.0
          %654 = vmatpush1.msra.mxu0 %v602
          %655 = vmatprep.subr.mxu0 0.0
          %656 = vmatpush1.msra.mxu0 %v601
          %657 = vmatprep.subr.mxu0 0.0
          %658 = vmatpush1.msra.mxu0 %v600
          %659 = vmatprep.subr.mxu0 0.0
          %660 = vmatpush1.msra.mxu0 %v599
          %661 = vmatprep.subr.mxu0 0.0
          %662 = vmatpush1.msra.mxu0 %v598
          %663 = vmatprep.subr.mxu0 0.0
          %664 = vmatpush1.msra.mxu0 %v597
          %665 = vmatprep.subr.mxu0 0.0
          %666 = vmatpush2.msra.mxu0 %v628
          %667 = vmatprep.subr.mxu0 0.0
          %668 = vmatpush2.msra.mxu0 %v627
          %669 = vmatprep.subr.mxu0 0.0
          %670 = vmatpush2.msra.mxu0 %v626
          %671 = vmatprep.subr.mxu0 0.0
          %672 = vmatpush2.msra.mxu0 %v625
          %673 = vmatprep.subr.mxu0 0.0
          %674 = vmatpush2.msra.mxu0 %v624
          %675 = vmatprep.subr.mxu0 0.0
          %676 = vmatpush2.msra.mxu0 %v623
          %677 = vmatprep.subr.mxu0 0.0
          %678 = vmatpush2.msra.mxu0 %v622
          %679 = vmatprep.subr.mxu0 0.0
          %680 = vmatpush2.msra.mxu0 %v621
          %681 = vmatprep.subr.mxu0 0.0
          %682 = vmatpush2.msra.mxu0 %v620
          %683 = vmatprep.subr.mxu0 0.0
          %684 = vmatpush2.msra.mxu0 %v619
          %685 = vmatprep.subr.mxu0 0.0
          %686 = vmatpush2.msra.mxu0 %v618
          %687 = vmatprep.subr.mxu0 0.0
          %688 = vmatpush2.msra.mxu0 %v617
          %689 = vmatprep.subr.mxu0 0.0
          %690 = vmatpush2.msra.mxu0 %v616
          %691 = vmatprep.subr.mxu0 0.0
          %692 = vmatpush2.msra.mxu0 %v615
          %693 = vmatprep.subr.mxu0 0.0
          %694 = vmatpush2.msra.mxu0 %v614
          %695 = vmatprep.subr.mxu0 0.0
          %696 = vmatpush2.msra.mxu0 %v613
          %697 = vmatprep.mubr.f32.mxu0 %v631
          %698 = vmatmul.mubr.f32.gmra.mxu0 %v297
          %v699 = vpop.f32.mrf.mxu0
          %v700 = vadd.f32 0.0, %v699
          %v701 = vpop.f32.mrf.mxu0
          %702 = vdwg.mxu0
          %v703 = vadd.f32 %v629, %v700
          %704 = vst [vmem:[#allocation2] sm:$0xf] %v703
        $region44: #{tpu_custom_call.1} parent=27 // pred_fallthru
          _
        // Predicated region
        $region45: #{tpu_custom_call.1} parent=27 // pred_check
          %p705 = pneg %p226
        $region46: #{tpu_custom_call.1} parent=27 // pred_check_branch
          %707 = sbr.rel (%p705) target = $region48
        $region47: #{tpu_custom_call.1} parent=27 // pred_region
          %v708 = vld [vmem:[#allocation2] sm:$0xf]
          %709 = vst [vmem:[%s225] sm:$0xf] %v708
        $region48: #{tpu_custom_call.1} parent=27 // pred_fallthru
          _
        %s710 = sand.u32 %s110, 1
        %s711 = scalar_lea.sflag [#allocation9], %s710
        %s712 = sand.u32 %s110, 1
        %s713 = smul.addr %s712, 4
        %s714 = scalar_lea.vmem [#allocation12], %s713
        // Predicated region
        $region49: #{tpu_custom_call.1} parent=27 // pred_check
          %p715 = pneg %p120
        $region50: #{tpu_custom_call.1} parent=27 // pred_check_branch
          %717 = sbr.rel (%p715) target = $region52
        $region51: #{tpu_custom_call.1} parent=27 // pred_region
          %s719 = ssub.s32 64, 64
          %720 = vsyncadd %s711, %s719
          %s721 = sadd.s32 %s33, %s32
          %s722 = smul.addr %s721, 64
          %s723 = scalar_lea.hbm %s3, %s722
          %s725 = sshll.u32 %s714, 4
          %s726 = int_to_ptr.vmem [resolvable:$true] %s725
          %728 = dma.vmem_to_hbm [thread:$0]  %s726, 64, %s723, %s711
        $region52: #{tpu_custom_call.1} parent=27 // pred_fallthru
          _
      $region28: #{tpu_custom_call.1} parent=5 // pred_fallthru
        _
      %p729 = scmp.le.s32.totalorder 2, %s22
      // Predicated region
      $region53: #{tpu_custom_call.1} parent=5 // pred_check
        %p730 = pneg %p729
      $region54: #{tpu_custom_call.1} parent=5 // pred_check_branch
        %732 = sbr.rel (%p730) target = $region56
      $region55: #{tpu_custom_call.1} parent=5 // pred_region
        %s733 = ssub.s32 %s22, 2
        // Predicated region
        $region57: #{tpu_custom_call.1} parent=55 // pred_check
          %p734 = pneg %p126
        $region58: #{tpu_custom_call.1} parent=55 // pred_check_branch
          %736 = sbr.rel (%p734) target = $region60
        $region59: #{tpu_custom_call.1} parent=55 // pred_region
          %s737 = sand.u32 %s111, 1
          %s738 = scalar_lea.sflag [#allocation9], %s737
          %s739 = sand.u32 %s111, 1
          %s740 = smul.addr %s739, 4
          %s741 = scalar_lea.vmem [#allocation12], %s740
          %742 = dma.done %s738, 64
        $region60: #{tpu_custom_call.1} parent=55 // pred_fallthru
          _
      $region56: #{tpu_custom_call.1} parent=5 // pred_fallthru
        _
    $region6: #{tpu_custom_call.1} parent=1 // loop_footer
      %s26 = sadd.s32 1, %s22
    $region7: #{tpu_custom_call.1} parent=1 // loop_footer_branch
      %21 = sbr.rel target = $region3
    $region8: #{tpu_custom_call.1} parent=1 // loop_exit
      _
    %743 = vsyncpa [#allocation8], 1
    %s744 = scalar_lea.sflag [#allocation8], 1
    %745 = vsyncpa %s744, 1
    %746 = vsyncpa [#allocation11], 1
    %s747 = scalar_lea.sflag [#allocation11], 1
    %748 = vsyncpa %s747, 1
    %749 = vsyncpa [#allocation9], 1
    %s750 = scalar_lea.sflag [#allocation9], 1
    %751 = vsyncpa %s750, 1

</llo_original>
